<compile_context>
chip_gen: v7x
topology: tpu7x:2x2x1
jax: 0.10.0
libtpu: 0.0.40
codegen_flags: <defaults>
</compile_context>

<pallas_src>
import math

import jax
import jax.numpy as jnp
from jax import lax
from jax.experimental import pallas as pl
from jax.experimental.pallas import tpu as pltpu


_MAX_DAYS = 30  # log(y!) chain is exact for integer y in [0, _MAX_DAYS]
_LOG_K = [math.log(float(k)) for k in range(2, _MAX_DAYS + 1)]


def _round_up(x, m):
    return ((x + m - 1) // m) * m


def _days_at_home_kernel(p_ref, s_ref, o_ref):
    # s_ref: (8, B_TILE) f32 in VMEM, batch on lanes.
    se = s_ref[0:1, :]                    # self_empl
    dy = s_ref[1:2, :]                    # dysp
    co = s_ref[2:3, :]                    # cough
    pa = s_ref[3:4, :]                    # pain
    na = s_ref[4:5, :]                    # nasal
    fe = s_ref[5:6, :]                    # fever (0 / 1 / 2)
    ab = s_ref[6:7, :]                    # antibiotics (0 / 1)
    y = s_ref[7:8, :]                     # observed days_at_home

    low_fever = (fe == 1.0).astype(jnp.float32)
    high_fever = (fe == 2.0).astype(jnp.float32)

    feats = (se, dy, co, pa, na, low_fever, high_fever)

    # Antibiotics-blended Poisson regression (ab in {0,1}):
    #   log_lambda = (b0 + ab*(b1-b0)) + sum_j (c0_j + ab*(c1_j-c0_j)) * x_j
    # Scalar params read from SMEM; vectors are (1, B_TILE) on the VPU.
    log_lambda = p_ref[0] + ab * (p_ref[8] - p_ref[0])
    for j, x in enumerate(feats):
        c = p_ref[1 + j] + ab * (p_ref[9 + j] - p_ref[1 + j])
        log_lambda = log_lambda + c * x

    # lgamma(y + 1) = log(y!) = sum_{k=2..MAX} log(k) * [y >= k]
    # TODO(synk): lax.lgamma has no Mosaic lowering; this unrolled chain is
    # exact only for integer y <= _MAX_DAYS (dataset maximum is 15).
    lg = jnp.zeros_like(y)
    for k, logk in zip(range(2, _MAX_DAYS + 1), _LOG_K):
        lg = lg + jnp.where(y >= float(k), jnp.float32(logk), jnp.float32(0.0))

    # Poisson log-likelihood: y*log(lambda) - lambda - lgamma(y+1)
    o_ref[...] = y * log_lambda - jnp.exp(log_lambda) - lg


def days_at_home_forward(sample, params, *, b_tile=2048):
    """sample: dict of 1-D f32 arrays (batch B); params: (2, 8) f32 packed parameters.

    Returns log P(days_at_home = y | parents) with shape (B,).
    """
    order = ["self_empl", "dysp", "cough", "pain", "nasal", "fever",
             "antibiotics", "days_at_home"]
    # Stack along axis 0 -> (8, B): features on sublanes, batch on lanes.
    slab = jnp.stack([sample[k].astype(jnp.float32) for k in order], axis=0)
    B = slab.shape[1]

    bt = min(b_tile, _round_up(max(B, 1), 128))       # lane tile, multiple of 128
    B_pad = _round_up(B, bt)
    if B_pad != B:
        slab = jnp.pad(slab, ((0, 0), (0, B_pad - B)))

    # Flat SMEM parameter vector: [bias_a0, coeff_a0[0..6], bias_a1, coeff_a1[0..6]]
    p_flat = params.reshape(16).astype(jnp.float32)

    log_p = pl.pallas_call(
        _days_at_home_kernel,
        out_shape=jax.ShapeDtypeStruct((1, B_pad), jnp.float32),
        grid=(B_pad // bt,),
        in_specs=[
            pl.BlockSpec(memory_space=pltpu.MemorySpace.SMEM),   # params (untiled)
            pl.BlockSpec((8, bt), lambda i: (0, i)),             # sample slab tile
        ],
        out_specs=pl.BlockSpec((1, bt), lambda i: (0, i)),       # lane-dense output
        compiler_params=pltpu.CompilerParams(
            dimension_semantics=("parallel",)),
    )(p_flat, slab)
    return log_p[0, :B]                                          # (B,)


def make_params(key, n_parents=7):
    """Deterministic analog of torch.rand init in DaysAtHome.__init__."""
    k0, k1, k2, k3 = jax.random.split(key, 4)
    bias_a0 = jax.random.uniform(k0, (1,), jnp.float32)
    coeff_a0 = jax.random.uniform(k1, (n_parents,), jnp.float32)
    bias_a1 = jax.random.uniform(k2, (1,), jnp.float32)
    coeff_a1 = jax.random.uniform(k3, (n_parents,), jnp.float32)
    params = jnp.stack([jnp.concatenate([bias_a0, coeff_a0]),
                        jnp.concatenate([bias_a1, coeff_a1])], axis=0)   # (2, 8)
    return params, (bias_a0, coeff_a0, bias_a1, coeff_a1)


def reference_forward(sample, bias_a0, coeff_a0, bias_a1, coeff_a1):
    fe = sample["fever"]
    low = jnp.where(fe == 1.0, jnp.ones_like(fe), jnp.zeros_like(fe))
    high = jnp.where(fe == 2.0, jnp.ones_like(fe), jnp.zeros_like(fe))
    y = sample["days_at_home"]
    l0 = (bias_a0 + coeff_a0[0] * sample["self_empl"] + coeff_a0[1] * sample["dysp"]
          + coeff_a0[2] * sample["cough"] + coeff_a0[3] * sample["pain"]
          + coeff_a0[4] * sample["nasal"] + coeff_a0[5] * low + coeff_a0[6] * high)
    l1 = (bias_a1 + coeff_a1[0] * sample["self_empl"] + coeff_a1[1] * sample["dysp"]
          + coeff_a1[2] * sample["cough"] + coeff_a1[3] * sample["pain"]
          + coeff_a1[4] * sample["nasal"] + coeff_a1[5] * low + coeff_a1[6] * high)
    log_lambda = jnp.where(sample["antibiotics"] == 1.0, l1, l0)
    return y * log_lambda - jnp.exp(log_lambda) - lax.lgamma(y + 1.0)


if __name__ == "__main__":
    key = jax.random.PRNGKey(0)
    kp, kd = jax.random.split(key)
    B = 8

    params, raw = make_params(kp)

    dkeys = jax.random.split(kd, 8)
    sample = {
        "self_empl":    jax.random.randint(dkeys[0], (B,), 0, 2).astype(jnp.float32),
        "dysp":         jax.random.randint(dkeys[1], (B,), 0, 2).astype(jnp.float32),
        "cough":        jax.random.randint(dkeys[2], (B,), 0, 2).astype(jnp.float32),
        "pain":         jax.random.randint(dkeys[3], (B,), 0, 2).astype(jnp.float32),
        "nasal":        jax.random.randint(dkeys[4], (B,), 0, 2).astype(jnp.float32),
        "fever":        jax.random.randint(dkeys[5], (B,), 0, 3).astype(jnp.float32),
        "antibiotics":  jax.random.randint(dkeys[6], (B,), 0, 2).astype(jnp.float32),
        "days_at_home": jax.random.randint(dkeys[7], (B,), 0, 15).astype(jnp.float32),
    }

    log_p = days_at_home_forward(sample, params)
    jax.block_until_ready(log_p)

    ref = reference_forward(sample, *raw)
    assert log_p.shape == (B,)
    assert jnp.allclose(log_p, ref, atol=1e-4, rtol=1e-5), (log_p, ref)

    print("KERNEL_OK")
</pallas_src>

<mosaic_0001>
module attributes {stable_mosaic.version = 11 : i64} {
  func.func @_days_at_home_kernel(%arg0: i32, %arg1: memref<16xf32, #tpu.memory_space<smem>>, %arg2: memref<8x128xf32, #tpu.memory_space<vmem>>, %arg3: memref<1x128xf32, #tpu.memory_space<vmem>>) attributes {dimension_semantics = [#tpu.dimension_semantics<parallel>], iteration_bounds = array<i64: 1>, scalar_prefetch = 0 : i64, scratch_operands = 0 : i64, tpu.core_type = #tpu.core_type<tc>, window_params = [{transform_indices = @transform_0, window_bounds = array<i64: 16>}, {transform_indices = @transform_1, window_bounds = array<i64: 8, 128>}, {transform_indices = @transform_2, window_bounds = array<i64: 1, 128>}]} {
    %c0 = arith.constant 0 : index
    %c0_0 = arith.constant 0 : index
    %0 = vector.load %arg2[%c0, %c0_0] : memref<8x128xf32, #tpu.memory_space<vmem>>, vector<1x128xf32>
    %c1 = arith.constant 1 : index
    %c0_1 = arith.constant 0 : index
    %1 = vector.load %arg2[%c1, %c0_1] : memref<8x128xf32, #tpu.memory_space<vmem>>, vector<1x128xf32>
    %c2 = arith.constant 2 : index
    %c0_2 = arith.constant 0 : index
    %2 = vector.load %arg2[%c2, %c0_2] : memref<8x128xf32, #tpu.memory_space<vmem>>, vector<1x128xf32>
    %c3 = arith.constant 3 : index
    %c0_3 = arith.constant 0 : index
    %3 = vector.load %arg2[%c3, %c0_3] : memref<8x128xf32, #tpu.memory_space<vmem>>, vector<1x128xf32>
    %c4 = arith.constant 4 : index
    %c0_4 = arith.constant 0 : index
    %4 = vector.load %arg2[%c4, %c0_4] : memref<8x128xf32, #tpu.memory_space<vmem>>, vector<1x128xf32>
    %c5 = arith.constant 5 : index
    %c0_5 = arith.constant 0 : index
    %5 = vector.load %arg2[%c5, %c0_5] : memref<8x128xf32, #tpu.memory_space<vmem>>, vector<1x128xf32>
    %c6 = arith.constant 6 : index
    %c0_6 = arith.constant 0 : index
    %6 = vector.load %arg2[%c6, %c0_6] : memref<8x128xf32, #tpu.memory_space<vmem>>, vector<1x128xf32>
    %c7 = arith.constant 7 : index
    %c0_7 = arith.constant 0 : index
    %7 = vector.load %arg2[%c7, %c0_7] : memref<8x128xf32, #tpu.memory_space<vmem>>, vector<1x128xf32>
    %cst = arith.constant 1.000000e+00 : f32
    %8 = vector.broadcast %cst : f32 to vector<1x128xf32>
    %9 = arith.cmpf oeq, %5, %8 : vector<1x128xf32>
    %10 = arith.extui %9 : vector<1x128xi1> to vector<1x128xi32>
    %11 = arith.sitofp %10 : vector<1x128xi32> to vector<1x128xf32>
    %cst_8 = arith.constant 2.000000e+00 : f32
    %12 = vector.broadcast %cst_8 : f32 to vector<1x128xf32>
    %13 = arith.cmpf oeq, %5, %12 : vector<1x128xf32>
    %14 = arith.extui %13 : vector<1x128xi1> to vector<1x128xi32>
    %15 = arith.sitofp %14 : vector<1x128xi32> to vector<1x128xf32>
    %c0_9 = arith.constant 0 : index
    %16 = memref.load %arg1[%c0_9] : memref<16xf32, #tpu.memory_space<smem>>
    %c8 = arith.constant 8 : index
    %17 = memref.load %arg1[%c8] : memref<16xf32, #tpu.memory_space<smem>>
    %c0_10 = arith.constant 0 : index
    %18 = memref.load %arg1[%c0_10] : memref<16xf32, #tpu.memory_space<smem>>
    %19 = arith.subf %17, %18 : f32
    %20 = vector.broadcast %19 : f32 to vector<1x128xf32>
    %21 = arith.mulf %6, %20 : vector<1x128xf32>
    %22 = vector.broadcast %16 : f32 to vector<1x128xf32>
    %23 = arith.addf %22, %21 : vector<1x128xf32>
    %c1_11 = arith.constant 1 : index
    %24 = memref.load %arg1[%c1_11] : memref<16xf32, #tpu.memory_space<smem>>
    %c9 = arith.constant 9 : index
    %25 = memref.load %arg1[%c9] : memref<16xf32, #tpu.memory_space<smem>>
    %c1_12 = arith.constant 1 : index
    %26 = memref.load %arg1[%c1_12] : memref<16xf32, #tpu.memory_space<smem>>
    %27 = arith.subf %25, %26 : f32
    %28 = vector.broadcast %27 : f32 to vector<1x128xf32>
    %29 = arith.mulf %6, %28 : vector<1x128xf32>
    %30 = vector.broadcast %24 : f32 to vector<1x128xf32>
    %31 = arith.addf %30, %29 : vector<1x128xf32>
    %32 = arith.mulf %31, %0 : vector<1x128xf32>
    %33 = arith.addf %23, %32 : vector<1x128xf32>
    %c2_13 = arith.constant 2 : index
    %34 = memref.load %arg1[%c2_13] : memref<16xf32, #tpu.memory_space<smem>>
    %c10 = arith.constant 10 : index
    %35 = memref.load %arg1[%c10] : memref<16xf32, #tpu.memory_space<smem>>
    %c2_14 = arith.constant 2 : index
    %36 = memref.load %arg1[%c2_14] : memref<16xf32, #tpu.memory_space<smem>>
    %37 = arith.subf %35, %36 : f32
    %38 = vector.broadcast %37 : f32 to vector<1x128xf32>
    %39 = arith.mulf %6, %38 : vector<1x128xf32>
    %40 = vector.broadcast %34 : f32 to vector<1x128xf32>
    %41 = arith.addf %40, %39 : vector<1x128xf32>
    %42 = arith.mulf %41, %1 : vector<1x128xf32>
    %43 = arith.addf %33, %42 : vector<1x128xf32>
    %c3_15 = arith.constant 3 : index
    %44 = memref.load %arg1[%c3_15] : memref<16xf32, #tpu.memory_space<smem>>
    %c11 = arith.constant 11 : index
    %45 = memref.load %arg1[%c11] : memref<16xf32, #tpu.memory_space<smem>>
    %c3_16 = arith.constant 3 : index
    %46 = memref.load %arg1[%c3_16] : memref<16xf32, #tpu.memory_space<smem>>
    %47 = arith.subf %45, %46 : f32
    %48 = vector.broadcast %47 : f32 to vector<1x128xf32>
    %49 = arith.mulf %6, %48 : vector<1x128xf32>
    %50 = vector.broadcast %44 : f32 to vector<1x128xf32>
    %51 = arith.addf %50, %49 : vector<1x128xf32>
    %52 = arith.mulf %51, %2 : vector<1x128xf32>
    %53 = arith.addf %43, %52 : vector<1x128xf32>
    %c4_17 = arith.constant 4 : index
    %54 = memref.load %arg1[%c4_17] : memref<16xf32, #tpu.memory_space<smem>>
    %c12 = arith.constant 12 : index
    %55 = memref.load %arg1[%c12] : memref<16xf32, #tpu.memory_space<smem>>
    %c4_18 = arith.constant 4 : index
    %56 = memref.load %arg1[%c4_18] : memref<16xf32, #tpu.memory_space<smem>>
    %57 = arith.subf %55, %56 : f32
    %58 = vector.broadcast %57 : f32 to vector<1x128xf32>
    %59 = arith.mulf %6, %58 : vector<1x128xf32>
    %60 = vector.broadcast %54 : f32 to vector<1x128xf32>
    %61 = arith.addf %60, %59 : vector<1x128xf32>
    %62 = arith.mulf %61, %3 : vector<1x128xf32>
    %63 = arith.addf %53, %62 : vector<1x128xf32>
    %c5_19 = arith.constant 5 : index
    %64 = memref.load %arg1[%c5_19] : memref<16xf32, #tpu.memory_space<smem>>
    %c13 = arith.constant 13 : index
    %65 = memref.load %arg1[%c13] : memref<16xf32, #tpu.memory_space<smem>>
    %c5_20 = arith.constant 5 : index
    %66 = memref.load %arg1[%c5_20] : memref<16xf32, #tpu.memory_space<smem>>
    %67 = arith.subf %65, %66 : f32
    %68 = vector.broadcast %67 : f32 to vector<1x128xf32>
    %69 = arith.mulf %6, %68 : vector<1x128xf32>
    %70 = vector.broadcast %64 : f32 to vector<1x128xf32>
    %71 = arith.addf %70, %69 : vector<1x128xf32>
    %72 = arith.mulf %71, %4 : vector<1x128xf32>
    %73 = arith.addf %63, %72 : vector<1x128xf32>
    %c6_21 = arith.constant 6 : index
    %74 = memref.load %arg1[%c6_21] : memref<16xf32, #tpu.memory_space<smem>>
    %c14 = arith.constant 14 : index
    %75 = memref.load %arg1[%c14] : memref<16xf32, #tpu.memory_space<smem>>
    %c6_22 = arith.constant 6 : index
    %76 = memref.load %arg1[%c6_22] : memref<16xf32, #tpu.memory_space<smem>>
    %77 = arith.subf %75, %76 : f32
    %78 = vector.broadcast %77 : f32 to vector<1x128xf32>
    %79 = arith.mulf %6, %78 : vector<1x128xf32>
    %80 = vector.broadcast %74 : f32 to vector<1x128xf32>
    %81 = arith.addf %80, %79 : vector<1x128xf32>
    %82 = arith.mulf %81, %11 : vector<1x128xf32>
    %83 = arith.addf %73, %82 : vector<1x128xf32>
    %c7_23 = arith.constant 7 : index
    %84 = memref.load %arg1[%c7_23] : memref<16xf32, #tpu.memory_space<smem>>
    %c15 = arith.constant 15 : index
    %85 = memref.load %arg1[%c15] : memref<16xf32, #tpu.memory_space<smem>>
    %c7_24 = arith.constant 7 : index
    %86 = memref.load %arg1[%c7_24] : memref<16xf32, #tpu.memory_space<smem>>
    %87 = arith.subf %85, %86 : f32
    %88 = vector.broadcast %87 : f32 to vector<1x128xf32>
    %89 = arith.mulf %6, %88 : vector<1x128xf32>
    %90 = vector.broadcast %84 : f32 to vector<1x128xf32>
    %91 = arith.addf %90, %89 : vector<1x128xf32>
    %92 = arith.mulf %91, %15 : vector<1x128xf32>
    %93 = arith.addf %83, %92 : vector<1x128xf32>
    %cst_25 = arith.constant 0.000000e+00 : f32
    %94 = vector.broadcast %cst_25 : f32 to vector<1x128xf32>
    %cst_26 = arith.constant 2.000000e+00 : f32
    %95 = vector.broadcast %cst_26 : f32 to vector<1x128xf32>
    %96 = arith.cmpf oge, %7, %95 : vector<1x128xf32>
    %cst_27 = arith.constant 0.693147182 : f32
    %cst_28 = arith.constant 0.000000e+00 : f32
    %97 = vector.broadcast %cst_27 : f32 to vector<1x128xf32>
    %98 = vector.broadcast %cst_28 : f32 to vector<1x128xf32>
    %99 = arith.select %96, %97, %98 : vector<1x128xi1>, vector<1x128xf32>
    %100 = arith.addf %94, %99 : vector<1x128xf32>
    %cst_29 = arith.constant 3.000000e+00 : f32
    %101 = vector.broadcast %cst_29 : f32 to vector<1x128xf32>
    %102 = arith.cmpf oge, %7, %101 : vector<1x128xf32>
    %cst_30 = arith.constant 1.09861231 : f32
    %cst_31 = arith.constant 0.000000e+00 : f32
    %103 = vector.broadcast %cst_30 : f32 to vector<1x128xf32>
    %104 = vector.broadcast %cst_31 : f32 to vector<1x128xf32>
    %105 = arith.select %102, %103, %104 : vector<1x128xi1>, vector<1x128xf32>
    %106 = arith.addf %100, %105 : vector<1x128xf32>
    %cst_32 = arith.constant 4.000000e+00 : f32
    %107 = vector.broadcast %cst_32 : f32 to vector<1x128xf32>
    %108 = arith.cmpf oge, %7, %107 : vector<1x128xf32>
    %cst_33 = arith.constant 1.38629436 : f32
    %cst_34 = arith.constant 0.000000e+00 : f32
    %109 = vector.broadcast %cst_33 : f32 to vector<1x128xf32>
    %110 = vector.broadcast %cst_34 : f32 to vector<1x128xf32>
    %111 = arith.select %108, %109, %110 : vector<1x128xi1>, vector<1x128xf32>
    %112 = arith.addf %106, %111 : vector<1x128xf32>
    %cst_35 = arith.constant 5.000000e+00 : f32
    %113 = vector.broadcast %cst_35 : f32 to vector<1x128xf32>
    %114 = arith.cmpf oge, %7, %113 : vector<1x128xf32>
    %cst_36 = arith.constant 1.60943794 : f32
    %cst_37 = arith.constant 0.000000e+00 : f32
    %115 = vector.broadcast %cst_36 : f32 to vector<1x128xf32>
    %116 = vector.broadcast %cst_37 : f32 to vector<1x128xf32>
    %117 = arith.select %114, %115, %116 : vector<1x128xi1>, vector<1x128xf32>
    %118 = arith.addf %112, %117 : vector<1x128xf32>
    %cst_38 = arith.constant 6.000000e+00 : f32
    %119 = vector.broadcast %cst_38 : f32 to vector<1x128xf32>
    %120 = arith.cmpf oge, %7, %119 : vector<1x128xf32>
    %cst_39 = arith.constant 1.79175949 : f32
    %cst_40 = arith.constant 0.000000e+00 : f32
    %121 = vector.broadcast %cst_39 : f32 to vector<1x128xf32>
    %122 = vector.broadcast %cst_40 : f32 to vector<1x128xf32>
    %123 = arith.select %120, %121, %122 : vector<1x128xi1>, vector<1x128xf32>
    %124 = arith.addf %118, %123 : vector<1x128xf32>
    %cst_41 = arith.constant 7.000000e+00 : f32
    %125 = vector.broadcast %cst_41 : f32 to vector<1x128xf32>
    %126 = arith.cmpf oge, %7, %125 : vector<1x128xf32>
    %cst_42 = arith.constant 1.9459101 : f32
    %cst_43 = arith.constant 0.000000e+00 : f32
    %127 = vector.broadcast %cst_42 : f32 to vector<1x128xf32>
    %128 = vector.broadcast %cst_43 : f32 to vector<1x128xf32>
    %129 = arith.select %126, %127, %128 : vector<1x128xi1>, vector<1x128xf32>
    %130 = arith.addf %124, %129 : vector<1x128xf32>
    %cst_44 = arith.constant 8.000000e+00 : f32
    %131 = vector.broadcast %cst_44 : f32 to vector<1x128xf32>
    %132 = arith.cmpf oge, %7, %131 : vector<1x128xf32>
    %cst_45 = arith.constant 2.07944155 : f32
    %cst_46 = arith.constant 0.000000e+00 : f32
    %133 = vector.broadcast %cst_45 : f32 to vector<1x128xf32>
    %134 = vector.broadcast %cst_46 : f32 to vector<1x128xf32>
    %135 = arith.select %132, %133, %134 : vector<1x128xi1>, vector<1x128xf32>
    %136 = arith.addf %130, %135 : vector<1x128xf32>
    %cst_47 = arith.constant 9.000000e+00 : f32
    %137 = vector.broadcast %cst_47 : f32 to vector<1x128xf32>
    %138 = arith.cmpf oge, %7, %137 : vector<1x128xf32>
    %cst_48 = arith.constant 2.19722462 : f32
    %cst_49 = arith.constant 0.000000e+00 : f32
    %139 = vector.broadcast %cst_48 : f32 to vector<1x128xf32>
    %140 = vector.broadcast %cst_49 : f32 to vector<1x128xf32>
    %141 = arith.select %138, %139, %140 : vector<1x128xi1>, vector<1x128xf32>
    %142 = arith.addf %136, %141 : vector<1x128xf32>
    %cst_50 = arith.constant 1.000000e+01 : f32
    %143 = vector.broadcast %cst_50 : f32 to vector<1x128xf32>
    %144 = arith.cmpf oge, %7, %143 : vector<1x128xf32>
    %cst_51 = arith.constant 2.30258512 : f32
    %cst_52 = arith.constant 0.000000e+00 : f32
    %145 = vector.broadcast %cst_51 : f32 to vector<1x128xf32>
    %146 = vector.broadcast %cst_52 : f32 to vector<1x128xf32>
    %147 = arith.select %144, %145, %146 : vector<1x128xi1>, vector<1x128xf32>
    %148 = arith.addf %142, %147 : vector<1x128xf32>
    %cst_53 = arith.constant 1.100000e+01 : f32
    %149 = vector.broadcast %cst_53 : f32 to vector<1x128xf32>
    %150 = arith.cmpf oge, %7, %149 : vector<1x128xf32>
    %cst_54 = arith.constant 2.39789534 : f32
    %cst_55 = arith.constant 0.000000e+00 : f32
    %151 = vector.broadcast %cst_54 : f32 to vector<1x128xf32>
    %152 = vector.broadcast %cst_55 : f32 to vector<1x128xf32>
    %153 = arith.select %150, %151, %152 : vector<1x128xi1>, vector<1x128xf32>
    %154 = arith.addf %148, %153 : vector<1x128xf32>
    %cst_56 = arith.constant 1.200000e+01 : f32
    %155 = vector.broadcast %cst_56 : f32 to vector<1x128xf32>
    %156 = arith.cmpf oge, %7, %155 : vector<1x128xf32>
    %cst_57 = arith.constant 2.48490667 : f32
    %cst_58 = arith.constant 0.000000e+00 : f32
    %157 = vector.broadcast %cst_57 : f32 to vector<1x128xf32>
    %158 = vector.broadcast %cst_58 : f32 to vector<1x128xf32>
    %159 = arith.select %156, %157, %158 : vector<1x128xi1>, vector<1x128xf32>
    %160 = arith.addf %154, %159 : vector<1x128xf32>
    %cst_59 = arith.constant 1.300000e+01 : f32
    %161 = vector.broadcast %cst_59 : f32 to vector<1x128xf32>
    %162 = arith.cmpf oge, %7, %161 : vector<1x128xf32>
    %cst_60 = arith.constant 2.56494927 : f32
    %cst_61 = arith.constant 0.000000e+00 : f32
    %163 = vector.broadcast %cst_60 : f32 to vector<1x128xf32>
    %164 = vector.broadcast %cst_61 : f32 to vector<1x128xf32>
    %165 = arith.select %162, %163, %164 : vector<1x128xi1>, vector<1x128xf32>
    %166 = arith.addf %160, %165 : vector<1x128xf32>
    %cst_62 = arith.constant 1.400000e+01 : f32
    %167 = vector.broadcast %cst_62 : f32 to vector<1x128xf32>
    %168 = arith.cmpf oge, %7, %167 : vector<1x128xf32>
    %cst_63 = arith.constant 2.6390574 : f32
    %cst_64 = arith.constant 0.000000e+00 : f32
    %169 = vector.broadcast %cst_63 : f32 to vector<1x128xf32>
    %170 = vector.broadcast %cst_64 : f32 to vector<1x128xf32>
    %171 = arith.select %168, %169, %170 : vector<1x128xi1>, vector<1x128xf32>
    %172 = arith.addf %166, %171 : vector<1x128xf32>
    %cst_65 = arith.constant 1.500000e+01 : f32
    %173 = vector.broadcast %cst_65 : f32 to vector<1x128xf32>
    %174 = arith.cmpf oge, %7, %173 : vector<1x128xf32>
    %cst_66 = arith.constant 2.70805025 : f32
    %cst_67 = arith.constant 0.000000e+00 : f32
    %175 = vector.broadcast %cst_66 : f32 to vector<1x128xf32>
    %176 = vector.broadcast %cst_67 : f32 to vector<1x128xf32>
    %177 = arith.select %174, %175, %176 : vector<1x128xi1>, vector<1x128xf32>
    %178 = arith.addf %172, %177 : vector<1x128xf32>
    %cst_68 = arith.constant 1.600000e+01 : f32
    %179 = vector.broadcast %cst_68 : f32 to vector<1x128xf32>
    %180 = arith.cmpf oge, %7, %179 : vector<1x128xf32>
    %cst_69 = arith.constant 2.77258873 : f32
    %cst_70 = arith.constant 0.000000e+00 : f32
    %181 = vector.broadcast %cst_69 : f32 to vector<1x128xf32>
    %182 = vector.broadcast %cst_70 : f32 to vector<1x128xf32>
    %183 = arith.select %180, %181, %182 : vector<1x128xi1>, vector<1x128xf32>
    %184 = arith.addf %178, %183 : vector<1x128xf32>
    %cst_71 = arith.constant 1.700000e+01 : f32
    %185 = vector.broadcast %cst_71 : f32 to vector<1x128xf32>
    %186 = arith.cmpf oge, %7, %185 : vector<1x128xf32>
    %cst_72 = arith.constant 2.83321333 : f32
    %cst_73 = arith.constant 0.000000e+00 : f32
    %187 = vector.broadcast %cst_72 : f32 to vector<1x128xf32>
    %188 = vector.broadcast %cst_73 : f32 to vector<1x128xf32>
    %189 = arith.select %186, %187, %188 : vector<1x128xi1>, vector<1x128xf32>
    %190 = arith.addf %184, %189 : vector<1x128xf32>
    %cst_74 = arith.constant 1.800000e+01 : f32
    %191 = vector.broadcast %cst_74 : f32 to vector<1x128xf32>
    %192 = arith.cmpf oge, %7, %191 : vector<1x128xf32>
    %cst_75 = arith.constant 2.8903718 : f32
    %cst_76 = arith.constant 0.000000e+00 : f32
    %193 = vector.broadcast %cst_75 : f32 to vector<1x128xf32>
    %194 = vector.broadcast %cst_76 : f32 to vector<1x128xf32>
    %195 = arith.select %192, %193, %194 : vector<1x128xi1>, vector<1x128xf32>
    %196 = arith.addf %190, %195 : vector<1x128xf32>
    %cst_77 = arith.constant 1.900000e+01 : f32
    %197 = vector.broadcast %cst_77 : f32 to vector<1x128xf32>
    %198 = arith.cmpf oge, %7, %197 : vector<1x128xf32>
    %cst_78 = arith.constant 2.94443893 : f32
    %cst_79 = arith.constant 0.000000e+00 : f32
    %199 = vector.broadcast %cst_78 : f32 to vector<1x128xf32>
    %200 = vector.broadcast %cst_79 : f32 to vector<1x128xf32>
    %201 = arith.select %198, %199, %200 : vector<1x128xi1>, vector<1x128xf32>
    %202 = arith.addf %196, %201 : vector<1x128xf32>
    %cst_80 = arith.constant 2.000000e+01 : f32
    %203 = vector.broadcast %cst_80 : f32 to vector<1x128xf32>
    %204 = arith.cmpf oge, %7, %203 : vector<1x128xf32>
    %cst_81 = arith.constant 2.99573231 : f32
    %cst_82 = arith.constant 0.000000e+00 : f32
    %205 = vector.broadcast %cst_81 : f32 to vector<1x128xf32>
    %206 = vector.broadcast %cst_82 : f32 to vector<1x128xf32>
    %207 = arith.select %204, %205, %206 : vector<1x128xi1>, vector<1x128xf32>
    %208 = arith.addf %202, %207 : vector<1x128xf32>
    %cst_83 = arith.constant 2.100000e+01 : f32
    %209 = vector.broadcast %cst_83 : f32 to vector<1x128xf32>
    %210 = arith.cmpf oge, %7, %209 : vector<1x128xf32>
    %cst_84 = arith.constant 3.04452252 : f32
    %cst_85 = arith.constant 0.000000e+00 : f32
    %211 = vector.broadcast %cst_84 : f32 to vector<1x128xf32>
    %212 = vector.broadcast %cst_85 : f32 to vector<1x128xf32>
    %213 = arith.select %210, %211, %212 : vector<1x128xi1>, vector<1x128xf32>
    %214 = arith.addf %208, %213 : vector<1x128xf32>
    %cst_86 = arith.constant 2.200000e+01 : f32
    %215 = vector.broadcast %cst_86 : f32 to vector<1x128xf32>
    %216 = arith.cmpf oge, %7, %215 : vector<1x128xf32>
    %cst_87 = arith.constant 3.09104252 : f32
    %cst_88 = arith.constant 0.000000e+00 : f32
    %217 = vector.broadcast %cst_87 : f32 to vector<1x128xf32>
    %218 = vector.broadcast %cst_88 : f32 to vector<1x128xf32>
    %219 = arith.select %216, %217, %218 : vector<1x128xi1>, vector<1x128xf32>
    %220 = arith.addf %214, %219 : vector<1x128xf32>
    %cst_89 = arith.constant 2.300000e+01 : f32
    %221 = vector.broadcast %cst_89 : f32 to vector<1x128xf32>
    %222 = arith.cmpf oge, %7, %221 : vector<1x128xf32>
    %cst_90 = arith.constant 3.13549423 : f32
    %cst_91 = arith.constant 0.000000e+00 : f32
    %223 = vector.broadcast %cst_90 : f32 to vector<1x128xf32>
    %224 = vector.broadcast %cst_91 : f32 to vector<1x128xf32>
    %225 = arith.select %222, %223, %224 : vector<1x128xi1>, vector<1x128xf32>
    %226 = arith.addf %220, %225 : vector<1x128xf32>
    %cst_92 = arith.constant 2.400000e+01 : f32
    %227 = vector.broadcast %cst_92 : f32 to vector<1x128xf32>
    %228 = arith.cmpf oge, %7, %227 : vector<1x128xf32>
    %cst_93 = arith.constant 3.17805386 : f32
    %cst_94 = arith.constant 0.000000e+00 : f32
    %229 = vector.broadcast %cst_93 : f32 to vector<1x128xf32>
    %230 = vector.broadcast %cst_94 : f32 to vector<1x128xf32>
    %231 = arith.select %228, %229, %230 : vector<1x128xi1>, vector<1x128xf32>
    %232 = arith.addf %226, %231 : vector<1x128xf32>
    %cst_95 = arith.constant 2.500000e+01 : f32
    %233 = vector.broadcast %cst_95 : f32 to vector<1x128xf32>
    %234 = arith.cmpf oge, %7, %233 : vector<1x128xf32>
    %cst_96 = arith.constant 3.21887589 : f32
    %cst_97 = arith.constant 0.000000e+00 : f32
    %235 = vector.broadcast %cst_96 : f32 to vector<1x128xf32>
    %236 = vector.broadcast %cst_97 : f32 to vector<1x128xf32>
    %237 = arith.select %234, %235, %236 : vector<1x128xi1>, vector<1x128xf32>
    %238 = arith.addf %232, %237 : vector<1x128xf32>
    %cst_98 = arith.constant 2.600000e+01 : f32
    %239 = vector.broadcast %cst_98 : f32 to vector<1x128xf32>
    %240 = arith.cmpf oge, %7, %239 : vector<1x128xf32>
    %cst_99 = arith.constant 3.25809646 : f32
    %cst_100 = arith.constant 0.000000e+00 : f32
    %241 = vector.broadcast %cst_99 : f32 to vector<1x128xf32>
    %242 = vector.broadcast %cst_100 : f32 to vector<1x128xf32>
    %243 = arith.select %240, %241, %242 : vector<1x128xi1>, vector<1x128xf32>
    %244 = arith.addf %238, %243 : vector<1x128xf32>
    %cst_101 = arith.constant 2.700000e+01 : f32
    %245 = vector.broadcast %cst_101 : f32 to vector<1x128xf32>
    %246 = arith.cmpf oge, %7, %245 : vector<1x128xf32>
    %cst_102 = arith.constant 3.29583693 : f32
    %cst_103 = arith.constant 0.000000e+00 : f32
    %247 = vector.broadcast %cst_102 : f32 to vector<1x128xf32>
    %248 = vector.broadcast %cst_103 : f32 to vector<1x128xf32>
    %249 = arith.select %246, %247, %248 : vector<1x128xi1>, vector<1x128xf32>
    %250 = arith.addf %244, %249 : vector<1x128xf32>
    %cst_104 = arith.constant 2.800000e+01 : f32
    %251 = vector.broadcast %cst_104 : f32 to vector<1x128xf32>
    %252 = arith.cmpf oge, %7, %251 : vector<1x128xf32>
    %cst_105 = arith.constant 3.33220458 : f32
    %cst_106 = arith.constant 0.000000e+00 : f32
    %253 = vector.broadcast %cst_105 : f32 to vector<1x128xf32>
    %254 = vector.broadcast %cst_106 : f32 to vector<1x128xf32>
    %255 = arith.select %252, %253, %254 : vector<1x128xi1>, vector<1x128xf32>
    %256 = arith.addf %250, %255 : vector<1x128xf32>
    %cst_107 = arith.constant 2.900000e+01 : f32
    %257 = vector.broadcast %cst_107 : f32 to vector<1x128xf32>
    %258 = arith.cmpf oge, %7, %257 : vector<1x128xf32>
    %cst_108 = arith.constant 3.36729574 : f32
    %cst_109 = arith.constant 0.000000e+00 : f32
    %259 = vector.broadcast %cst_108 : f32 to vector<1x128xf32>
    %260 = vector.broadcast %cst_109 : f32 to vector<1x128xf32>
    %261 = arith.select %258, %259, %260 : vector<1x128xi1>, vector<1x128xf32>
    %262 = arith.addf %256, %261 : vector<1x128xf32>
    %cst_110 = arith.constant 3.000000e+01 : f32
    %263 = vector.broadcast %cst_110 : f32 to vector<1x128xf32>
    %264 = arith.cmpf oge, %7, %263 : vector<1x128xf32>
    %cst_111 = arith.constant 3.40119743 : f32
    %cst_112 = arith.constant 0.000000e+00 : f32
    %265 = vector.broadcast %cst_111 : f32 to vector<1x128xf32>
    %266 = vector.broadcast %cst_112 : f32 to vector<1x128xf32>
    %267 = arith.select %264, %265, %266 : vector<1x128xi1>, vector<1x128xf32>
    %268 = arith.addf %262, %267 : vector<1x128xf32>
    %269 = arith.mulf %7, %93 : vector<1x128xf32>
    %270 = math.exp %93 : vector<1x128xf32>
    %271 = arith.subf %269, %270 : vector<1x128xf32>
    %272 = arith.subf %271, %268 : vector<1x128xf32>
    %c0_113 = arith.constant 0 : index
    %c0_114 = arith.constant 0 : index
    %273 = vector.load %arg3[%c0_113, %c0_114] : memref<1x128xf32, #tpu.memory_space<vmem>>, vector<1x128xf32>
    tpu.vector_store %arg3[%c0_113, %c0_114], %272 {strides = array<i32>} : memref<1x128xf32, #tpu.memory_space<vmem>>, vector<1x128xf32>,
    return
  }
  func.func @transform_0(%arg0: i32) -> i32 {
    %c0_i32 = arith.constant 0 : i32
    %c0_i32_0 = arith.constant 0 : i32
    return %c0_i32 : i32
  }
  func.func @transform_1(%arg0: i32) -> (i32, i32) {
    %c0_i32 = arith.constant 0 : i32
    %c0_i32_0 = arith.constant 0 : i32
    return %c0_i32, %arg0 : i32, i32
  }
  func.func @transform_2(%arg0: i32) -> (i32, i32) {
    %c0_i32 = arith.constant 0 : i32
    %c0_i32_0 = arith.constant 0 : i32
    return %c0_i32, %arg0 : i32, i32
  }
}

</mosaic_0001>

<llo_original>
// kernel: tpu_custom_call.1
$region0: #{tpu_custom_call.1}
  #allocation0 [shape = 'u32[]', space=smem, size = 0x4, offset = 0x4, fixed_abs, tag = 'smem constant byte address 0x4 - core index']
  #allocation1 [shape = 'u32[144,128]{1,0:T(1,128)}', space=vmem, size = 0x12000, scoped, tag = 'internal scratch']
  %s0 = inlined_call_operand.hbm [shape: f32[16], index: 0, kind: input, shape index: {}]
  %s1 = inlined_call_operand.hbm [shape: f32[8,128], index: 1, kind: input, shape index: {}]
  %s2 = inlined_call_operand.hbm [shape: f32[1,128], index: 2, kind: output, shape index: {}]
  %s3 = sld [smem:[#allocation0]]
  $region26: #{tpu_custom_call.1} parent=0
    _
  %s5 = ssub.s32 1, %s3
  %s6 = scalar_select 0, %s5, %s3
  $region1: #{tpu_custom_call.1} parent=0
    #allocation2 [shape = 'u8[512]{0}', space=smem, size = 0x200, scoped, tag = 'input window, operand 0, single buffered']
    #allocation3 [shape = 's32[1]{0}', space=sflag, size = 0x4, scoped, tag = 'scoped memory for tpu_custom_call.1']
    #allocation4 [shape = 's32[1]{0}', space=sflag, size = 0x4, scoped, tag = 'scoped memory for tpu_custom_call.1']
    #allocation5 [shape = 's32[1]{0}', space=sflag, size = 0x4, scoped, tag = 'scoped memory for tpu_custom_call.1']
    #allocation6 [shape = 'u8[4096]{0}', space=vmem, size = 0x1000, scoped, tag = 'input window, operand 1, single buffered']
    #allocation7 [shape = 'u8[512]{0}', space=vmem, size = 0x400, scoped, tag = 'output window, operand 0, single buffered']
    %7 = vsyncpa [#allocation5], 0
    %8 = vsyncpa [#allocation3], 0
    %9 = vsyncpa [#allocation4], 0
    // Predicated region
    $region2: #{tpu_custom_call.1} parent=1 // pred_check
      _
    $region3: #{tpu_custom_call.1} parent=1 // pred_check_branch
      %11 = sbr.rel (0) target = $region5
    $region4: #{tpu_custom_call.1} parent=1 // pred_region
      %s13 = ssub.s32 16, 16
      %14 = vsyncadd [#allocation5], %s13
      %17 = dma.hbm_to_smem %s0, 16, [#allocation2], [#allocation5]
    $region5: #{tpu_custom_call.1} parent=1 // pred_fallthru
      _
    // Predicated region
    $region6: #{tpu_custom_call.1} parent=1 // pred_check
      _
    $region7: #{tpu_custom_call.1} parent=1 // pred_check_branch
      %19 = sbr.rel (0) target = $region9
    $region8: #{tpu_custom_call.1} parent=1 // pred_region
      %s21 = ssub.s32 128, 128
      %22 = vsyncadd [#allocation3], %s21
      %s24 = sshll.u32 [#allocation6], 4
      %s25 = int_to_ptr.vmem [resolvable:$true] %s24
      %27 = dma.hbm_to_vmem [thread:$0]  %s1, 128, %s25, [#allocation3]
    $region9: #{tpu_custom_call.1} parent=1 // pred_fallthru
      _
    // Predicated region
    $region10: #{tpu_custom_call.1} parent=1 // pred_check
      _
    $region11: #{tpu_custom_call.1} parent=1 // pred_check_branch
      %29 = sbr.rel (0) target = $region13
    $region12: #{tpu_custom_call.1} parent=1 // pred_region
      %30 = dma.done [#allocation5], 16
    $region13: #{tpu_custom_call.1} parent=1 // pred_fallthru
      _
    // Predicated region
    $region14: #{tpu_custom_call.1} parent=1 // pred_check
      _
    $region15: #{tpu_custom_call.1} parent=1 // pred_check_branch
      %32 = sbr.rel (0) target = $region17
    $region16: #{tpu_custom_call.1} parent=1 // pred_region
      %33 = dma.done [#allocation3], 128
    $region17: #{tpu_custom_call.1} parent=1 // pred_fallthru
      _
    %34 = sfence
    %v35 = vld [vmem:[#allocation6] sm:$0x1]
    %v36 = vld [vmem:[#allocation6 + $0x1] sm:$0x1]
    %v37 = vld [vmem:[#allocation6 + $0x2] sm:$0x1]
    %v38 = vld [vmem:[#allocation6 + $0x3] sm:$0x1]
    %v39 = vld [vmem:[#allocation6 + $0x4] sm:$0x1]
    %v40 = vld [vmem:[#allocation6 + $0x5] sm:$0x1]
    %v41 = vld [vmem:[#allocation6 + $0x6] sm:$0x1]
    %v42 = vld [vmem:[#allocation6 + $0x7] sm:$0x1]
    %vm43 = vcmp.eq.f32.partialorder %v40, 1.0
    %v44 = vsel %vm43, 1, 0
    %v45 = vcvt.s32.f32 %v44
    %vm46 = vcmp.eq.f32.partialorder %v40, 2.0
    %v47 = vsel %vm46, 1, 0
    %v48 = vcvt.s32.f32 %v47
    %s49 = sld [smem:[#allocation2]]
    %s50 = sld [smem:[#allocation2 + $0x8]]
    %s51 = ssub.f32 %s50, %s49
    %v52 = vstv %s51
    %v53 = vmul.f32 %v41, %v52
    %v54 = vstv %s49
    %v55 = vadd.f32 %v54, %v53
    %s56 = sld [smem:[#allocation2 + $0x1]]
    %s57 = sld [smem:[#allocation2 + $0x9]]
    %s58 = ssub.f32 %s57, %s56
    %v59 = vstv %s58
    %v60 = vmul.f32 %v41, %v59
    %v61 = vstv %s56
    %v62 = vadd.f32 %v61, %v60
    %v63 = vmul.f32 %v62, %v35
    %v64 = vadd.f32 %v55, %v63
    %s65 = sld [smem:[#allocation2 + $0x2]]
    %s66 = sld [smem:[#allocation2 + $0xa]]
    %s67 = ssub.f32 %s66, %s65
    %v68 = vstv %s67
    %v69 = vmul.f32 %v41, %v68
    %v70 = vstv %s65
    %v71 = vadd.f32 %v70, %v69
    %v72 = vmul.f32 %v71, %v36
    %v73 = vadd.f32 %v64, %v72
    %s74 = sld [smem:[#allocation2 + $0x3]]
    %s75 = sld [smem:[#allocation2 + $0xb]]
    %s76 = ssub.f32 %s75, %s74
    %v77 = vstv %s76
    %v78 = vmul.f32 %v41, %v77
    %v79 = vstv %s74
    %v80 = vadd.f32 %v79, %v78
    %v81 = vmul.f32 %v80, %v37
    %v82 = vadd.f32 %v73, %v81
    %s83 = sld [smem:[#allocation2 + $0x4]]
    %s84 = sld [smem:[#allocation2 + $0xc]]
    %s85 = ssub.f32 %s84, %s83
    %v86 = vstv %s85
    %v87 = vmul.f32 %v41, %v86
    %v88 = vstv %s83
    %v89 = vadd.f32 %v88, %v87
    %v90 = vmul.f32 %v89, %v38
    %v91 = vadd.f32 %v82, %v90
    %s92 = sld [smem:[#allocation2 + $0x5]]
    %s93 = sld [smem:[#allocation2 + $0xd]]
    %s94 = ssub.f32 %s93, %s92
    %v95 = vstv %s94
    %v96 = vmul.f32 %v41, %v95
    %v97 = vstv %s92
    %v98 = vadd.f32 %v97, %v96
    %v99 = vmul.f32 %v98, %v39
    %v100 = vadd.f32 %v91, %v99
    %s101 = sld [smem:[#allocation2 + $0x6]]
    %s102 = sld [smem:[#allocation2 + $0xe]]
    %s103 = ssub.f32 %s102, %s101
    %v104 = vstv %s103
    %v105 = vmul.f32 %v41, %v104
    %v106 = vstv %s101
    %v107 = vadd.f32 %v106, %v105
    %v108 = vmul.f32 %v107, %v45
    %v109 = vadd.f32 %v100, %v108
    %s110 = sld [smem:[#allocation2 + $0x7]]
    %s111 = sld [smem:[#allocation2 + $0xf]]
    %s112 = ssub.f32 %s111, %s110
    %v113 = vstv %s112
    %v114 = vmul.f32 %v41, %v113
    %v115 = vstv %s110
    %v116 = vadd.f32 %v115, %v114
    %v117 = vmul.f32 %v116, %v48
    %v118 = vadd.f32 %v109, %v117
    %vm119 = vcmp.ge.f32.partialorder %v42, 2.0
    %v120 = vsel %vm119, 0.6931472, 0.0
    %v121 = vadd.f32 %v120, 0.0
    %vm122 = vcmp.ge.f32.partialorder %v42, 3.0
    %v123 = vsel %vm122, 1.0986123, 0.0
    %v124 = vadd.f32 %v121, %v123
    %vm125 = vcmp.ge.f32.partialorder %v42, 4.0
    %v126 = vsel %vm125, 1.3862944, 0.0
    %v127 = vadd.f32 %v124, %v126
    %vm128 = vcmp.ge.f32.partialorder %v42, 5.0
    %v129 = vsel %vm128, 1.609438, 0.0
    %v130 = vadd.f32 %v127, %v129
    %vm131 = vcmp.ge.f32.partialorder %v42, 6.0
    %v132 = vsel %vm131, 1.7917595, 0.0
    %v133 = vadd.f32 %v130, %v132
    %vm134 = vcmp.ge.f32.partialorder %v42, 7.0
    %v135 = vsel %vm134, 1.9459101, 0.0
    %v136 = vadd.f32 %v133, %v135
    %vm137 = vcmp.ge.f32.partialorder %v42, 8.0
    %v138 = vsel %vm137, 2.0794415, 0.0
    %v139 = vadd.f32 %v136, %v138
    %vm140 = vcmp.ge.f32.partialorder %v42, 9.0
    %v141 = vsel %vm140, 2.1972246, 0.0
    %v142 = vadd.f32 %v139, %v141
    %vm143 = vcmp.ge.f32.partialorder %v42, 10.0
    %v144 = vsel %vm143, 2.3025851, 0.0
    %v145 = vadd.f32 %v142, %v144
    %vm146 = vcmp.ge.f32.partialorder %v42, 11.0
    %v147 = vsel %vm146, 2.3978953, 0.0
    %v148 = vadd.f32 %v145, %v147
    %vm149 = vcmp.ge.f32.partialorder %v42, 12.0
    %v150 = vsel %vm149, 2.4849067, 0.0
    %v151 = vadd.f32 %v148, %v150
    %vm152 = vcmp.ge.f32.partialorder %v42, 13.0
    %v153 = vsel %vm152, 2.5649493, 0.0
    %v154 = vadd.f32 %v151, %v153
    %vm155 = vcmp.ge.f32.partialorder %v42, 14.0
    %v156 = vsel %vm155, 2.6390574, 0.0
    %v157 = vadd.f32 %v154, %v156
    %vm158 = vcmp.ge.f32.partialorder %v42, 15.0
    %v159 = vsel %vm158, 2.7080503, 0.0
    %v160 = vadd.f32 %v157, %v159
    %vm161 = vcmp.ge.f32.partialorder %v42, 16.0
    %v162 = vsel %vm161, 2.7725887, 0.0
    %v163 = vadd.f32 %v160, %v162
    %vm164 = vcmp.ge.f32.partialorder %v42, 17.0
    %v165 = vsel %vm164, 2.8332133, 0.0
    %v166 = vadd.f32 %v163, %v165
    %vm167 = vcmp.ge.f32.partialorder %v42, 18.0
    %v168 = vsel %vm167, 2.8903718, 0.0
    %v169 = vadd.f32 %v166, %v168
    %vm170 = vcmp.ge.f32.partialorder %v42, 19.0
    %v171 = vsel %vm170, 2.944439, 0.0
    %v172 = vadd.f32 %v169, %v171
    %vm173 = vcmp.ge.f32.partialorder %v42, 20.0
    %v174 = vsel %vm173, 2.9957323, 0.0
    %v175 = vadd.f32 %v172, %v174
    %vm176 = vcmp.ge.f32.partialorder %v42, 21.0
    %v177 = vsel %vm176, 3.0445225, 0.0
    %v178 = vadd.f32 %v175, %v177
    %vm179 = vcmp.ge.f32.partialorder %v42, 22.0
    %v180 = vsel %vm179, 3.0910425, 0.0
    %v181 = vadd.f32 %v178, %v180
    %vm182 = vcmp.ge.f32.partialorder %v42, 23.0
    %v183 = vsel %vm182, 3.1354942, 0.0
    %v184 = vadd.f32 %v181, %v183
    %vm185 = vcmp.ge.f32.partialorder %v42, 24.0
    %v186 = vsel %vm185, 3.1780539, 0.0
    %v187 = vadd.f32 %v184, %v186
    %vm188 = vcmp.ge.f32.partialorder %v42, 25.0
    %v189 = vsel %vm188, 3.218876, 0.0
    %v190 = vadd.f32 %v187, %v189
    %vm191 = vcmp.ge.f32.partialorder %v42, 26.0
    %v192 = vsel %vm191, 3.2580965, 0.0
    %v193 = vadd.f32 %v190, %v192
    %vm194 = vcmp.ge.f32.partialorder %v42, 27.0
    %v195 = vsel %vm194, 3.295837, 0.0
    %v196 = vadd.f32 %v193, %v195
    %vm197 = vcmp.ge.f32.partialorder %v42, 28.0
    %v198 = vsel %vm197, 3.3322046, 0.0
    %v199 = vadd.f32 %v196, %v198
    %vm200 = vcmp.ge.f32.partialorder %v42, 29.0
    %v201 = vsel %vm200, 3.3672957, 0.0
    %v202 = vadd.f32 %v199, %v201
    %vm203 = vcmp.ge.f32.partialorder %v42, 30.0
    %v204 = vsel %vm203, 3.4011974, 0.0
    %v205 = vadd.f32 %v202, %v204
    %v206 = vmul.f32 %v42, %v118
    %v207 = vmul.f32 %v118, 1.442695
    %v208 = vpow.pop %v207
    %v209 = vsub.f32 %v206, %v208
    %v210 = vsub.f32 %v209, %v205
    %211 = vst [vmem:[#allocation7] sm:$0x1] %v210
    // Predicated region
    $region18: #{tpu_custom_call.1} parent=1 // pred_check
      _
    $region19: #{tpu_custom_call.1} parent=1 // pred_check_branch
      %213 = sbr.rel (0) target = $region21
    $region20: #{tpu_custom_call.1} parent=1 // pred_region
      %s215 = ssub.s32 16, 16
      %216 = vsyncadd [#allocation4], %s215
      %s218 = sshll.u32 [#allocation7], 4
      %s219 = int_to_ptr.vmem [resolvable:$true] %s218
      %221 = dma.vmem_to_hbm [thread:$0]  %s219, 16, %s2, [#allocation4]
    $region21: #{tpu_custom_call.1} parent=1 // pred_fallthru
      _
    // Predicated region
    $region22: #{tpu_custom_call.1} parent=1 // pred_check
      _
    $region23: #{tpu_custom_call.1} parent=1 // pred_check_branch
      %223 = sbr.rel (0) target = $region25
    $region24: #{tpu_custom_call.1} parent=1 // pred_region
      %224 = dma.done [#allocation4], 16
    $region25: #{tpu_custom_call.1} parent=1 // pred_fallthru
      _
    %225 = vsyncpa [#allocation3], 1
    %226 = vsyncpa [#allocation4], 1
    %227 = vsyncpa [#allocation5], 1

</llo_original>
